<compile_context>
chip_gen: v7x
topology: tpu7x:2x2x1
jax: 0.10.0
libtpu: 0.0.40
codegen_flags: <defaults>
</compile_context>

<pallas_src>
import functools
import math

import jax
import jax.numpy as jnp
from jax import lax
from jax.experimental import pallas as pl
from jax.experimental.pallas import tpu as pltpu


def _round_up(a, b):
    return -(-a // b) * b


def _pow_factor(one_minus_p, gamma):
    """(1 - p_t) ** gamma with a repeated-multiply fast path for small ints."""
    g_int = int(round(gamma))
    if abs(gamma - g_int) < 1e-12 and 0 < g_int <= 4:
        r = one_minus_p                      # no exp/log on the EUP
        for _ in range(g_int - 1):
            r = r * one_minus_p
        return r
    return one_minus_p ** gamma             # generic (non-integer) gamma


def _focal_kernel(x_ref, t_ref, out_ref, *, gamma, eps, tile_n,
                  tiles_per_shard, n_valid):
    shard = pl.program_id(0)
    step = pl.program_id(1)

    # The (1,1,1) output block stays resident across the inner ("arbitrary")
    # step axis (its index_map ignores `step`), so it doubles as the per-shard
    # accumulator -- no lane-sparse scratch column, no separate epilogue.
    @pl.when(step == 0)
    def _():
        out_ref[...] = jnp.zeros_like(out_ref)

    x = x_ref[...].astype(jnp.float32)       # (tile_n, C); post-DMA cast is free
    t = t_ref[...]                           # (tile_n, 1) int32

    # Numerically-stable log-sum-exp over classes; the softmax matrix is never
    # materialized, divided, or clipped.
    m = jnp.max(x, axis=1, keepdims=True)                      # (tile_n, 1)
    lse = m + jnp.log(jnp.sum(jnp.exp(x - m), axis=1, keepdims=True))

    # Gather x[i, target[i]] via where+sum (no int->float convert, no multiply).
    cls = lax.broadcasted_iota(jnp.int32, x.shape, 1)          # (tile_n, C)
    x_t = jnp.sum(jnp.where(cls == t, x, 0.0), axis=1, keepdims=True)

    # -log(clip(softmax)[i, t_i]) == clip(lse - x_t, -log(1-eps), -log(eps))
    # by monotonicity of -log, so we clip the log directly and skip an exp/log
    # round trip per row.
    loss = jnp.clip(lse - x_t, -math.log1p(-eps), -math.log(eps))
    if gamma != 0.0:
        p_t = jnp.exp(-loss)                 # == clipped softmax probability
        loss = loss * _pow_factor(1.0 - p_t, gamma)

    # Zero rows past the true batch size: the tail of the last partial block
    # (its OOB rows were never DMA'd and hold garbage) and any overrun grid
    # cells. jnp.where selects 0 even if the dead branch is NaN/Inf, and this
    # mask runs after all per-row math.
    row0 = (shard * tiles_per_shard + step) * tile_n
    rows = row0 + lax.broadcasted_iota(jnp.int32, (tile_n, 1), 0)
    loss = jnp.where(rows < n_valid, loss, 0.0)

    # One cross-sublane reduce per step; scalar accumulate into the resident
    # output block.
    out_ref[...] += jnp.sum(loss)


def _tpu_defaults():
    """(vmem_capacity_bytes, default num_shards) with safe fallbacks."""
    vmem_cap = 128 << 20
    try:
        info = pltpu.get_tpu_info()
        vmem_cap = int(getattr(info, "vmem_capacity_bytes", vmem_cap))
    except Exception:
        pass
    # v7x: 64 MiB VMEM per TensorCore but 2 TCs/chip -> shard the row loop so
    # megacore can split it. v5e/v6e: a single TC -> a second shard is just a
    # serial outer loop (pure overhead).
    num_shards = 2 if vmem_cap <= (64 << 20) else 1
    return vmem_cap, num_shards


def focal_loss_without_onehot(x, target, *, gamma=0.0, eps=1e-7,
                              tile_n=None, num_shards=None,
                              vmem_block_budget_bytes=None):
    """x: (N, C) float logits, target: (N,) int class indices. Scalar f32 sum."""
    N, C = x.shape
    # Inputs stream in their native dtype (no wrapper f32 copy) and the batch
    # is NOT padded -- remainder rows are masked inside the kernel.
    t2d = target.astype(jnp.int32).reshape(N, 1)

    vmem_cap, default_shards = _tpu_defaults()
    if num_shards is None:
        num_shards = default_shards
    if vmem_block_budget_bytes is None:
        # Total VMEM devoted to the double-buffered input blocks.
        vmem_block_budget_bytes = (16 << 20) if vmem_cap <= (64 << 20) else (32 << 20)

    itemsize = int(jnp.dtype(x.dtype).itemsize)
    sub = 8 * max(1, 4 // itemsize)          # 8 (f32) / 16 (bf16) / 32 (int8)
    lane_c = _round_up(C, 128)               # lane-padded class dim in VMEM

    # ---- tile_n sized by VMEM bytes (not a fixed row cap) ----
    if tile_n is None:
        # Per-row VMEM footprint of the lane-padded logits + int32 target
        # blocks, x2 for double buffering.
        per_row = 2 * (lane_c * itemsize + 128 * 4)
        tile_n = max(sub, (vmem_block_budget_bytes // per_row) // sub * sub)
        tile_n = min(tile_n, _round_up(N, sub))   # don't over-allocate tiny N
    assert tile_n % 8 == 0

    total_tiles = -(-N // tile_n)                        # cdiv
    num_shards = max(1, min(int(num_shards), total_tiles))
    tiles_per_shard = -(-total_tiles // num_shards)
    last_block = total_tiles - 1

    # Overrun grid cells (when total_tiles % num_shards != 0) clamp to the last
    # real block so every DMA starts in bounds; their nominal row indices are
    # >= N, so the in-kernel mask zeroes their contribution.
    def idx_map(s, i):
        return (jnp.minimum(s * tiles_per_shard + i, last_block), 0)

    kernel = functools.partial(
        _focal_kernel, gamma=float(gamma), eps=float(eps),
        tile_n=tile_n, tiles_per_shard=tiles_per_shard, n_valid=N)

    # Generation-aware VMEM limit: actual double-buffered footprint + slack,
    # capped well under the per-TC capacity (64 MiB on v7x, 128 MiB on v5e/v6e).
    block_vmem = 2 * tile_n * (lane_c * itemsize + 128 * 4)
    vmem_limit_cap = (40 << 20) if vmem_cap <= (64 << 20) else (96 << 20)
    vmem_limit = int(min(max(block_vmem + (4 << 20), 16 << 20), vmem_limit_cap))

    out = pl.pallas_call(
        kernel,
        out_shape=jax.ShapeDtypeStruct((num_shards, 1, 1), jnp.float32),
        grid_spec=pltpu.PrefetchScalarGridSpec(
            num_scalar_prefetch=0,
            grid=(num_shards, tiles_per_shard),
            in_specs=[
                pl.BlockSpec((tile_n, C), idx_map),
                pl.BlockSpec((tile_n, 1), idx_map),
            ],
            out_specs=pl.BlockSpec((1, 1, 1), lambda s, i: (s, 0, 0)),
        ),
        compiler_params=pltpu.CompilerParams(
            dimension_semantics=("parallel", "arbitrary"),
            vmem_limit_bytes=vmem_limit,
        ),
        cost_estimate=pl.CostEstimate(
            flops=6 * N * C + 8 * N,
            transcendentals=N * C + 2 * N,
            bytes_accessed=N * C * itemsize + 4 * N + 4 * num_shards,
        ),
    )(x, t2d)

    # Per-shard partial sums (one per TensorCore on v7x) summed by the caller.
    return jnp.sum(out)


def _reference(x, target, gamma=0.0, eps=1e-7):
    p = jax.nn.softmax(x.astype(jnp.float32), axis=1)
    p = jnp.clip(p, eps, 1.0 - eps)
    p_t = jnp.take_along_axis(
        p, target.reshape(-1, 1).astype(jnp.int32), axis=1)[:, 0]
    return jnp.sum(-jnp.log(p_t) * (1.0 - p_t) ** gamma)


if __name__ == "__main__":
    key = jax.random.PRNGKey(0)
    kx, kt = jax.random.split(key)

    N, C = 50, 10                      # small classification problem (N not a multiple of 8)
    x = jax.random.normal(kx, (N, C), dtype=jnp.float32)
    target = jax.random.randint(kt, (N,), 0, C, dtype=jnp.int32)
    eps = 1e-7

    # gamma = 2 (common config; integer fast path), auto tile / auto shards.
    out2 = jax.block_until_ready(
        focal_loss_without_onehot(x, target, gamma=2.0, eps=eps))
    ref2 = _reference(x, target, gamma=2.0, eps=eps)
    assert jnp.allclose(out2, ref2, rtol=1e-5, atol=1e-5), (out2, ref2)

    # gamma = 0 (module default) -- the per-row EUP chain is skipped entirely.
    out0 = jax.block_until_ready(
        focal_loss_without_onehot(x, target, gamma=0.0, eps=eps))
    ref0 = _reference(x, target, gamma=0.0, eps=eps)
    assert jnp.allclose(out0, ref0, rtol=1e-5, atol=1e-5), (out0, ref0)

    # Non-integer gamma (generic pow path) + tiny tile and 2 shards to exercise
    # the multi-shard / multi-step / remainder-mask code paths without padding.
    out15 = jax.block_until_ready(
        focal_loss_without_onehot(x, target, gamma=1.5, eps=eps,
                                  tile_n=8, num_shards=2))
    ref15 = _reference(x, target, gamma=1.5, eps=eps)
    assert jnp.allclose(out15, ref15, rtol=1e-5, atol=1e-5), (out15, ref15)

    # 3 shards over 7 tiles -> overrun grid cells exercise the clamped
    # index_map + full-tile masking path.
    out3 = jax.block_until_ready(
        focal_loss_without_onehot(x, target, gamma=2.0, eps=eps,
                                  tile_n=8, num_shards=3))
    assert jnp.allclose(out3, ref2, rtol=1e-5, atol=1e-5), (out3, ref2)

    # Native bf16 streaming (no wrapper upcast); reference sees the same
    # bf16-rounded values upcast to f32.
    x_bf16 = x.astype(jnp.bfloat16)
    outb = jax.block_until_ready(
        focal_loss_without_onehot(x_bf16, target, gamma=2.0, eps=eps))
    refb = _reference(x_bf16, target, gamma=2.0, eps=eps)
    assert jnp.allclose(outb, refb, rtol=1e-5, atol=1e-4), (outb, refb)

    print("KERNEL_OK")
</pallas_src>

<mosaic_0001>
module attributes {stable_mosaic.version = 11 : i64} {
  func.func @_focal_kernel(%arg0: i32, %arg1: i32, %arg2: memref<56x10xf32, #tpu.memory_space<vmem>>, %arg3: memref<56x1xi32, #tpu.memory_space<vmem>>, %arg4: memref<1x1x1xf32, #tpu.memory_space<vmem>>) attributes {dimension_semantics = [#tpu.dimension_semantics<parallel>, #tpu.dimension_semantics<arbitrary>], iteration_bounds = array<i64: 1, 1>, scalar_prefetch = 0 : i64, scratch_operands = 0 : i64, tpu.core_type = #tpu.core_type<tc>, window_params = [{transform_indices = @transform_0, window_bounds = array<i64: 56, 10>}, {transform_indices = @transform_1, window_bounds = array<i64: 56, 1>}, {transform_indices = @transform_2, window_bounds = array<i64: 1, 1, 1>}]} {
    %c0_i32 = arith.constant 0 : i32
    %0 = arith.cmpi eq, %arg1, %c0_i32 : i32
    %1 = arith.extui %0 : i1 to i32
    %c0_i32_0 = arith.constant 0 : i32
    %2 = arith.cmpi ne, %1, %c0_i32_0 : i32
    scf.if %2 {
      %cst_19 = arith.constant 0.000000e+00 : f32
      %51 = vector.broadcast %cst_19 : f32 to vector<1x1x1xf32>
      %c0_20 = arith.constant 0 : index
      %c0_21 = arith.constant 0 : index
      %c0_22 = arith.constant 0 : index
      %52 = vector.load %arg4[%c0_20, %c0_21, %c0_22] : memref<1x1x1xf32, #tpu.memory_space<vmem>>, vector<1x1x1xf32>
      tpu.vector_store %arg4[%c0_20, %c0_21, %c0_22], %51 {strides = array<i32>} : memref<1x1x1xf32, #tpu.memory_space<vmem>>, vector<1x1x1xf32>,
    } else {
    }
    %c0 = arith.constant 0 : index
    %c0_1 = arith.constant 0 : index
    %3 = vector.load %arg2[%c0, %c0_1] : memref<56x10xf32, #tpu.memory_space<vmem>>, vector<56x10xf32>
    %c0_2 = arith.constant 0 : index
    %c0_3 = arith.constant 0 : index
    %4 = vector.load %arg3[%c0_2, %c0_3] : memref<56x1xi32, #tpu.memory_space<vmem>>, vector<56x1xi32>
    %cst = arith.constant dense<0xFF800000> : vector<56xf32>
    %5 = vector.multi_reduction <maximumf>, %3, %cst [1] : vector<56x10xf32> to vector<56xf32>
    %6 = vector.shape_cast %5 : vector<56xf32> to vector<56x1xf32>
    %7 = vector.broadcast %6 : vector<56x1xf32> to vector<56x10xf32>
    %8 = arith.subf %3, %7 : vector<56x10xf32>
    %9 = math.exp %8 : vector<56x10xf32>
    %cst_4 = arith.constant dense<0.000000e+00> : vector<56xf32>
    %10 = vector.multi_reduction <add>, %9, %cst_4 [1] : vector<56x10xf32> to vector<56xf32>
    %11 = vector.shape_cast %10 : vector<56xf32> to vector<56x1xf32>
    %12 = math.log %11 : vector<56x1xf32>
    %13 = arith.addf %6, %12 : vector<56x1xf32>
    %14 = tpu.iota {dimensions = array<i32: 1>} : vector<56x10xi32>
    %15 = vector.broadcast %4 : vector<56x1xi32> to vector<56x10xi32>
    %16 = arith.cmpi eq, %14, %15 : vector<56x10xi32>
    %cst_5 = arith.constant 0.000000e+00 : f32
    %17 = vector.broadcast %cst_5 : f32 to vector<56x10xf32>
    %18 = arith.select %16, %3, %17 : vector<56x10xi1>, vector<56x10xf32>
    %cst_6 = arith.constant dense<0.000000e+00> : vector<56xf32>
    %19 = vector.multi_reduction <add>, %18, %cst_6 [1] : vector<56x10xf32> to vector<56xf32>
    %20 = vector.shape_cast %19 : vector<56xf32> to vector<56x1xf32>
    %21 = arith.subf %13, %20 : vector<56x1xf32>
    %cst_7 = arith.constant 1.00000008E-7 : f32
    %cst_8 = arith.constant 16.1180954 : f32
    %22 = vector.broadcast %cst_7 : f32 to vector<56x1xf32>
    %23 = arith.maximumf %22, %21 : vector<56x1xf32>
    %24 = vector.broadcast %cst_8 : f32 to vector<56x1xf32>
    %25 = arith.minimumf %24, %23 : vector<56x1xf32>
    %cst_9 = arith.constant 0.000000e+00 : f32
    %26 = vector.broadcast %cst_9 : f32 to vector<56x1xf32>
    %27 = arith.subf %26, %25 : vector<56x1xf32>
    %28 = math.exp %27 : vector<56x1xf32>
    %cst_10 = arith.constant 1.000000e+00 : f32
    %29 = vector.broadcast %cst_10 : f32 to vector<56x1xf32>
    %30 = arith.subf %29, %28 : vector<56x1xf32>
    %31 = arith.mulf %30, %30 : vector<56x1xf32>
    %32 = arith.mulf %25, %31 : vector<56x1xf32>
    %c1_i32 = arith.constant 1 : i32
    %33 = arith.muli %arg0, %c1_i32 : i32
    %34 = arith.addi %33, %arg1 : i32
    %c56_i32 = arith.constant 56 : i32
    %35 = arith.muli %34, %c56_i32 : i32
    %36 = tpu.iota {dimensions = array<i32: 0>} : vector<56x1xi32>
    %37 = vector.broadcast %35 : i32 to vector<56x1xi32>
    %38 = arith.addi %37, %36 : vector<56x1xi32>
    %c50_i32 = arith.constant 50 : i32
    %39 = vector.broadcast %c50_i32 : i32 to vector<56x1xi32>
    %40 = arith.cmpi slt, %38, %39 : vector<56x1xi32>
    %cst_11 = arith.constant 0.000000e+00 : f32
    %41 = vector.broadcast %cst_11 : f32 to vector<56x1xf32>
    %42 = arith.select %40, %32, %41 : vector<56x1xi1>, vector<56x1xf32>
    %c0_12 = arith.constant 0 : index
    %c0_13 = arith.constant 0 : index
    %c0_14 = arith.constant 0 : index
    %43 = vector.load %arg4[%c0_12, %c0_13, %c0_14] : memref<1x1x1xf32, #tpu.memory_space<vmem>>, vector<1x1x1xf32>
    %44 = vector.shape_cast %42 : vector<56x1xf32> to vector<1x56x1xf32>
    %cst_15 = arith.constant dense<0.000000e+00> : vector<1xf32>
    %45 = vector.multi_reduction <add>, %44, %cst_15 [1, 2] : vector<1x56x1xf32> to vector<1xf32>
    %46 = vector.shape_cast %45 : vector<1xf32> to vector<1x1x1xf32>
    %47 = vector.extract %46[0, 0, 0] : f32 from vector<1x1x1xf32>
    %48 = vector.broadcast %47 : f32 to vector<1x1x1xf32>
    %49 = arith.addf %43, %48 : vector<1x1x1xf32>
    %c0_16 = arith.constant 0 : index
    %c0_17 = arith.constant 0 : index
    %c0_18 = arith.constant 0 : index
    %50 = vector.load %arg4[%c0_16, %c0_17, %c0_18] : memref<1x1x1xf32, #tpu.memory_space<vmem>>, vector<1x1x1xf32>
    tpu.vector_store %arg4[%c0_16, %c0_17, %c0_18], %49 {strides = array<i32>} : memref<1x1x1xf32, #tpu.memory_space<vmem>>, vector<1x1x1xf32>,
    return
  }
  func.func @transform_0(%arg0: i32, %arg1: i32) -> (i32, i32) {
    %c1_i32 = arith.constant 1 : i32
    %0 = arith.muli %arg0, %c1_i32 : i32
    %1 = arith.addi %0, %arg1 : i32
    %c0_i32 = arith.constant 0 : i32
    %2 = arith.minsi %1, %c0_i32 : i32
    %c0_i32_0 = arith.constant 0 : i32
    %c0_i32_1 = arith.constant 0 : i32
    return %2, %c0_i32_0 : i32, i32
  }
  func.func @transform_1(%arg0: i32, %arg1: i32) -> (i32, i32) {
    %c1_i32 = arith.constant 1 : i32
    %0 = arith.muli %arg0, %c1_i32 : i32
    %1 = arith.addi %0, %arg1 : i32
    %c0_i32 = arith.constant 0 : i32
    %2 = arith.minsi %1, %c0_i32 : i32
    %c0_i32_0 = arith.constant 0 : i32
    %c0_i32_1 = arith.constant 0 : i32
    return %2, %c0_i32_0 : i32, i32
  }
  func.func @transform_2(%arg0: i32, %arg1: i32) -> (i32, i32, i32) {
    %c0_i32 = arith.constant 0 : i32
    %c0_i32_0 = arith.constant 0 : i32
    %c0_i32_1 = arith.constant 0 : i32
    return %arg0, %c0_i32, %c0_i32_0 : i32, i32, i32
  }
}

</mosaic_0001>

<llo_original>
// kernel: tpu_custom_call.1
$region0: #{tpu_custom_call.1}
  #allocation0 [shape = 'u32[]', space=smem, size = 0x4, offset = 0x4, fixed_abs, tag = 'smem constant byte address 0x4 - core index']
  #allocation1 [shape = 'u32[144,128]{1,0:T(1,128)}', space=vmem, size = 0x12000, scoped, tag = 'internal scratch']
  %s0 = inlined_call_operand.vmem [shape: f32[50,10], index: 0, kind: input, shape index: {}]
  %s1 = inlined_call_operand.vmem [shape: s32[50,1], index: 1, kind: input, shape index: {}]
  %s2 = inlined_call_operand.hbm [shape: f32[1,1,1], index: 2, kind: output, shape index: {}]
  %s3 = sld [smem:[#allocation0]]
  $region22: #{tpu_custom_call.1} parent=0
    _
  %s5 = ssub.s32 1, %s3
  %s6 = scalar_select 0, %s5, %s3
  $region1: #{tpu_custom_call.1} parent=0
    #allocation2 [shape = 'u8[512]{0}', space=vmem, size = 0x400, scoped, tag = 'output window, operand 0, single buffered']
    #allocation3 [shape = 's32[1]{0}', space=sflag, size = 0x4, scoped, tag = 'scoped memory for tpu_custom_call.1']
    %7 = vsyncpa [#allocation3], 0
    // Predicated region
    $region2: #{tpu_custom_call.1} parent=1 // pred_check
      _
    $region3: #{tpu_custom_call.1} parent=1 // pred_check_branch
      %9 = sbr.rel (0) target = $region5
    $region4: #{tpu_custom_call.1} parent=1 // pred_region
      %s10 = sadd.s32 0, 0
      %p11 = scmp.lt.s32.totalorder %s10, 0
      %s12 = scalar_select %p11, %s10, 0
      %s13 = smul.u32 7, %s12
      %p14 = scmp.lt.s32.totalorder %s13, 6
      %s15 = scalar_select %p14, %s13, 6
      %s16 = smul.addr %s15, 8
      %s17 = scalar_lea.vmem %s0, %s16
      %s18 = sadd.s32 0, 0
      %p19 = scmp.lt.s32.totalorder %s18, 0
      %s20 = scalar_select %p19, %s18, 0
      %s21 = smul.u32 7, %s20
    $region5: #{tpu_custom_call.1} parent=1 // pred_fallthru
      _
    // Predicated region
    $region6: #{tpu_custom_call.1} parent=1 // pred_check
      _
    $region7: #{tpu_custom_call.1} parent=1 // pred_check_branch
      %23 = sbr.rel (0) target = $region9
    $region8: #{tpu_custom_call.1} parent=1 // pred_region
      %s24 = sadd.s32 0, 0
      %p25 = scmp.lt.s32.totalorder %s24, 0
      %s26 = scalar_select %p25, %s24, 0
      %s27 = smul.u32 7, %s26
      %p28 = scmp.lt.s32.totalorder %s27, 6
      %s29 = scalar_select %p28, %s27, 6
      %s30 = smul.addr %s29, 8
      %s31 = scalar_lea.vmem %s1, %s30
      %s32 = sadd.s32 0, 0
      %p33 = scmp.lt.s32.totalorder %s32, 0
      %s34 = scalar_select %p33, %s32, 0
      %s35 = smul.u32 7, %s34
    $region9: #{tpu_custom_call.1} parent=1 // pred_fallthru
      _
    %s36 = sadd.s32 0, 0
    %p37 = scmp.lt.s32.totalorder %s36, 0
    %s38 = scalar_select %p37, %s36, 0
    %s39 = smul.u32 7, %s38
    %p40 = scmp.lt.s32.totalorder %s39, 6
    %s41 = scalar_select %p40, %s39, 6
    %s42 = smul.addr %s41, 8
    %s43 = scalar_lea.vmem %s0, %s42
    %s44 = sadd.s32 0, 0
    %p45 = scmp.lt.s32.totalorder %s44, 0
    %s46 = scalar_select %p45, %s44, 0
    %s47 = smul.u32 7, %s46
    %p48 = scmp.lt.s32.totalorder %s47, 6
    %s49 = scalar_select %p48, %s47, 6
    %s50 = smul.addr %s49, 8
    %s51 = scalar_lea.vmem %s1, %s50
    %s52 = sadd.s32 0, 0
    %p53 = scmp.lt.s32.totalorder %s52, 0
    %s54 = scalar_select %p53, %s52, 0
    %s55 = smul.u32 7, %s54
    %p56 = scmp.lt.s32.totalorder %s55, 6
    %s57 = scalar_select %p56, %s55, 6
    %s58 = smul.addr %s57, 8
    %s59 = scalar_lea.vmem %s0, %s58
    %s60 = sadd.s32 0, 0
    %p61 = scmp.lt.s32.totalorder %s60, 0
    %s62 = scalar_select %p61, %s60, 0
    %s63 = smul.u32 7, %s62
    %s64 = sadd.s32 0, 0
    %p65 = scmp.lt.s32.totalorder %s64, 0
    %s66 = scalar_select %p65, %s64, 0
    %s67 = smul.u32 7, %s66
    %p68 = scmp.lt.s32.totalorder %s67, 6
    %s69 = scalar_select %p68, %s67, 6
    %s70 = smul.addr %s69, 8
    %s71 = scalar_lea.vmem %s1, %s70
    %s72 = sadd.s32 0, 0
    %p73 = scmp.lt.s32.totalorder %s72, 0
    %s74 = scalar_select %p73, %s72, 0
    %s75 = smul.u32 7, %s74
    %p76 = scmp.eq.s32.totalorder 0, 0
    // Predicated region
    $region10: #{tpu_custom_call.1} parent=1 // pred_check
      %p77 = pneg %p76
    $region11: #{tpu_custom_call.1} parent=1 // pred_check_branch
      %79 = sbr.rel (%p77) target = $region13
    $region12: #{tpu_custom_call.1} parent=1 // pred_region
      %vm80 = vcmask 0
      %81 = vst.msk [vmem:[#allocation2] sm:$0x1] %vm80, 0.0
    $region13: #{tpu_custom_call.1} parent=1 // pred_fallthru
      _
    %v82 = vld [vmem:[%s59] sm:$0xff]
    %v83 = vld [vmem:[%s59 + $0x8] sm:$0xff]
    %v84 = vld [vmem:[%s59 + $0x10] sm:$0xff]
    %v85 = vld [vmem:[%s59 + $0x18] sm:$0xff]
    %v86 = vld [vmem:[%s59 + $0x20] sm:$0xff]
    %v87 = vld [vmem:[%s59 + $0x28] sm:$0xff]
    %v88 = vld [vmem:[%s59 + $0x30] sm:$0xff]
    %v89 = vld [vmem:[%s71] sm:$0xff]
    %v90 = vld [vmem:[%s71 + $0x8] sm:$0xff]
    %v91 = vld [vmem:[%s71 + $0x10] sm:$0xff]
    %v92 = vld [vmem:[%s71 + $0x18] sm:$0xff]
    %v93 = vld [vmem:[%s71 + $0x20] sm:$0xff]
    %v94 = vld [vmem:[%s71 + $0x28] sm:$0xff]
    %v95 = vld [vmem:[%s71 + $0x30] sm:$0xff]
    %vm96 = vcmask 80896
    %v97 = vsel %vm96, %v82, -inf
    %98 = vmax.xlane.f32.xlu0 %v97
    %v99 = vpop.xlane.xlu0 %98
    %v100 = vsel %vm96, %v83, -inf
    %101 = vmax.xlane.f32.xlu0 %v100
    %v102 = vpop.xlane.xlu0 %101
    %v103 = vsel %vm96, %v84, -inf
    %104 = vmax.xlane.f32.xlu0 %v103
    %v105 = vpop.xlane.xlu0 %104
    %v106 = vsel %vm96, %v85, -inf
    %107 = vmax.xlane.f32.xlu0 %v106
    %v108 = vpop.xlane.xlu0 %107
    %v109 = vsel %vm96, %v86, -inf
    %110 = vmax.xlane.f32.xlu0 %v109
    %v111 = vpop.xlane.xlu0 %110
    %v112 = vsel %vm96, %v87, -inf
    %113 = vmax.xlane.f32.xlu0 %v112
    %v114 = vpop.xlane.xlu0 %113
    %v115 = vsel %vm96, %v88, -inf
    %116 = vmax.xlane.f32.xlu0 %v115
    %v117 = vpop.xlane.xlu0 %116
    %v118 = vsub.f32 %v82, %v99
    %v119 = vsub.f32 %v83, %v102
    %v120 = vsub.f32 %v84, %v105
    %v121 = vsub.f32 %v85, %v108
    %v122 = vsub.f32 %v86, %v111
    %v123 = vsub.f32 %v87, %v114
    %v124 = vsub.f32 %v88, %v117
    %v125 = vmul.f32 %v118, 1.442695
    %v126 = vpow.pop %v125
    %v127 = vmul.f32 %v119, 1.442695
    %v128 = vpow.pop %v127
    %v129 = vmul.f32 %v120, 1.442695
    %v130 = vpow.pop %v129
    %v131 = vmul.f32 %v121, 1.442695
    %v132 = vpow.pop %v131
    %v133 = vmul.f32 %v122, 1.442695
    %v134 = vpow.pop %v133
    %v135 = vmul.f32 %v123, 1.442695
    %v136 = vpow.pop %v135
    %v137 = vmul.f32 %v124, 1.442695
    %v138 = vpow.pop %v137
    %v139 = vsel %vm96, %v126, 0.0
    %140 = vadd.xlane.f32.xlu0 %v139
    %v141 = vpop.xlane.xlu0 %140
    %v142 = vsel %vm96, %v128, 0.0
    %143 = vadd.xlane.f32.xlu0 %v142
    %v144 = vpop.xlane.xlu0 %143
    %v145 = vsel %vm96, %v130, 0.0
    %146 = vadd.xlane.f32.xlu0 %v145
    %v147 = vpop.xlane.xlu0 %146
    %v148 = vsel %vm96, %v132, 0.0
    %149 = vadd.xlane.f32.xlu0 %v148
    %v150 = vpop.xlane.xlu0 %149
    %v151 = vsel %vm96, %v134, 0.0
    %152 = vadd.xlane.f32.xlu0 %v151
    %v153 = vpop.xlane.xlu0 %152
    %v154 = vsel %vm96, %v136, 0.0
    %155 = vadd.xlane.f32.xlu0 %v154
    %v156 = vpop.xlane.xlu0 %155
    %v157 = vsel %vm96, %v138, 0.0
    %158 = vadd.xlane.f32.xlu0 %v157
    %v159 = vpop.xlane.xlu0 %158
    %v160 = vlog2.pop %v141
    %v161 = vmul.f32 %v160, 0.6931472
    %v162 = vlog2.pop %v144
    %v163 = vmul.f32 %v162, 0.6931472
    %v164 = vlog2.pop %v147
    %v165 = vmul.f32 %v164, 0.6931472
    %v166 = vlog2.pop %v150
    %v167 = vmul.f32 %v166, 0.6931472
    %v168 = vlog2.pop %v153
    %v169 = vmul.f32 %v168, 0.6931472
    %v170 = vlog2.pop %v156
    %v171 = vmul.f32 %v170, 0.6931472
    %v172 = vlog2.pop %v159
    %v173 = vmul.f32 %v172, 0.6931472
    %v174 = vadd.f32 %v99, %v161
    %v175 = vadd.f32 %v102, %v163
    %v176 = vadd.f32 %v105, %v165
    %v177 = vadd.f32 %v108, %v167
    %v178 = vadd.f32 %v111, %v169
    %v179 = vadd.f32 %v114, %v171
    %v180 = vadd.f32 %v117, %v173
    %v181 = vlaneseq
    %v182 = vand.u32 %v181, 127
    %183 = vset.pattern.permute.xlu0 0
    %184 = vperm.xlu0 %183, %v89
    %v185 = vpop.permute.xlu0 %184
    %186 = vset.pattern.permute.xlu0 0
    %187 = vperm.xlu0 %186, %v90
    %v188 = vpop.permute.xlu0 %187
    %189 = vset.pattern.permute.xlu0 0
    %190 = vperm.xlu0 %189, %v91
    %v191 = vpop.permute.xlu0 %190
    %192 = vset.pattern.permute.xlu0 0
    %193 = vperm.xlu0 %192, %v92
    %v194 = vpop.permute.xlu0 %193
    %195 = vset.pattern.permute.xlu0 0
    %196 = vperm.xlu0 %195, %v93
    %v197 = vpop.permute.xlu0 %196
    %198 = vset.pattern.permute.xlu0 0
    %199 = vperm.xlu0 %198, %v94
    %v200 = vpop.permute.xlu0 %199
    %201 = vset.pattern.permute.xlu0 0
    %202 = vperm.xlu0 %201, %v95
    %v203 = vpop.permute.xlu0 %202
    %vm204 = vcmp.eq.s32.totalorder %v182, %v185
    %vm205 = vcmp.eq.s32.totalorder %v182, %v188
    %vm206 = vcmp.eq.s32.totalorder %v182, %v191
    %vm207 = vcmp.eq.s32.totalorder %v182, %v194
    %vm208 = vcmp.eq.s32.totalorder %v182, %v197
    %vm209 = vcmp.eq.s32.totalorder %v182, %v200
    %vm210 = vcmp.eq.s32.totalorder %v182, %v203
    %v211 = vsel %vm204, %v82, 0.0
    %v212 = vsel %vm205, %v83, 0.0
    %v213 = vsel %vm206, %v84, 0.0
    %v214 = vsel %vm207, %v85, 0.0
    %v215 = vsel %vm208, %v86, 0.0
    %v216 = vsel %vm209, %v87, 0.0
    %v217 = vsel %vm210, %v88, 0.0
    %v218 = vsel %vm96, %v211, 0.0
    %219 = vadd.xlane.f32.xlu0 %v218
    %v220 = vpop.xlane.xlu0 %219
    %v221 = vsel %vm96, %v212, 0.0
    %222 = vadd.xlane.f32.xlu0 %v221
    %v223 = vpop.xlane.xlu0 %222
    %v224 = vsel %vm96, %v213, 0.0
    %225 = vadd.xlane.f32.xlu0 %v224
    %v226 = vpop.xlane.xlu0 %225
    %v227 = vsel %vm96, %v214, 0.0
    %228 = vadd.xlane.f32.xlu0 %v227
    %v229 = vpop.xlane.xlu0 %228
    %v230 = vsel %vm96, %v215, 0.0
    %231 = vadd.xlane.f32.xlu0 %v230
    %v232 = vpop.xlane.xlu0 %231
    %v233 = vsel %vm96, %v216, 0.0
    %234 = vadd.xlane.f32.xlu0 %v233
    %v235 = vpop.xlane.xlu0 %234
    %v236 = vsel %vm96, %v217, 0.0
    %237 = vadd.xlane.f32.xlu0 %v236
    %v238 = vpop.xlane.xlu0 %237
    %v239 = vsub.f32 %v174, %v220
    %v240 = vsub.f32 %v175, %v223
    %v241 = vsub.f32 %v176, %v226
    %v242 = vsub.f32 %v177, %v229
    %v243 = vsub.f32 %v178, %v232
    %v244 = vsub.f32 %v179, %v235
    %v245 = vsub.f32 %v180, %v238
    %v246 = vmax.f32 %v239, 1.0000001e-07
    %v247 = vmax.f32 %v240, 1.0000001e-07
    %v248 = vmax.f32 %v241, 1.0000001e-07
    %v249 = vmax.f32 %v242, 1.0000001e-07
    %v250 = vmax.f32 %v243, 1.0000001e-07
    %v251 = vmax.f32 %v244, 1.0000001e-07
    %v252 = vmax.f32 %v245, 1.0000001e-07
    %v253 = vmin.f32 %v246, 16.118095
    %v254 = vmin.f32 %v247, 16.118095
    %v255 = vmin.f32 %v248, 16.118095
    %v256 = vmin.f32 %v249, 16.118095
    %v257 = vmin.f32 %v250, 16.118095
    %v258 = vmin.f32 %v251, 16.118095
    %v259 = vmin.f32 %v252, 16.118095
    %v260 = vsub.f32 0.0, %v253
    %v261 = vsub.f32 0.0, %v254
    %v262 = vsub.f32 0.0, %v255
    %v263 = vsub.f32 0.0, %v256
    %v264 = vsub.f32 0.0, %v257
    %v265 = vsub.f32 0.0, %v258
    %v266 = vsub.f32 0.0, %v259
    %v267 = vmul.f32 %v260, 1.442695
    %v268 = vpow.pop %v267
    %v269 = vmul.f32 %v261, 1.442695
    %v270 = vpow.pop %v269
    %v271 = vmul.f32 %v262, 1.442695
    %v272 = vpow.pop %v271
    %v273 = vmul.f32 %v263, 1.442695
    %v274 = vpow.pop %v273
    %v275 = vmul.f32 %v264, 1.442695
    %v276 = vpow.pop %v275
    %v277 = vmul.f32 %v265, 1.442695
    %v278 = vpow.pop %v277
    %v279 = vmul.f32 %v266, 1.442695
    %v280 = vpow.pop %v279
    %v281 = vsub.f32 1.0, %v268
    %v282 = vsub.f32 1.0, %v270
    %v283 = vsub.f32 1.0, %v272
    %v284 = vsub.f32 1.0, %v274
    %v285 = vsub.f32 1.0, %v276
    %v286 = vsub.f32 1.0, %v278
    %v287 = vsub.f32 1.0, %v280
    %v288 = vmul.f32 %v281, %v281
    %v289 = vmul.f32 %v282, %v282
    %v290 = vmul.f32 %v283, %v283
    %v291 = vmul.f32 %v284, %v284
    %v292 = vmul.f32 %v285, %v285
    %v293 = vmul.f32 %v286, %v286
    %v294 = vmul.f32 %v287, %v287
    %v295 = vmul.f32 %v253, %v288
    %v296 = vmul.f32 %v254, %v289
    %v297 = vmul.f32 %v255, %v290
    %v298 = vmul.f32 %v256, %v291
    %v299 = vmul.f32 %v257, %v292
    %v300 = vmul.f32 %v258, %v293
    %v301 = vmul.f32 %v259, %v294
    %s302 = sadd.s32 0, 0
    %s303 = smul.u32 %s302, 56
    %v304 = vlaneseq
    %v305 = vshrl.u32 %v304, 7
    %v306 = vadd.s32 %v305, 8
    %v307 = vadd.s32 %v305, 16
    %v308 = vadd.s32 %v305, 24
    %v309 = vadd.s32 %v305, 32
    %v310 = vadd.s32 %v305, 40
    %v311 = vadd.s32 %v305, 48
    %v312 = vstv %s303
    %v313 = vadd.s32 %v312, %v305
    %v314 = vadd.s32 %v312, %v306
    %v315 = vadd.s32 %v312, %v307
    %v316 = vadd.s32 %v312, %v308
    %v317 = vadd.s32 %v312, %v309
    %v318 = vadd.s32 %v312, %v310
    %v319 = vadd.s32 %v312, %v311
    %vm320 = vcmp.lt.s32.totalorder %v313, 50
    %vm321 = vcmp.lt.s32.totalorder %v314, 50
    %vm322 = vcmp.lt.s32.totalorder %v315, 50
    %vm323 = vcmp.lt.s32.totalorder %v316, 50
    %vm324 = vcmp.lt.s32.totalorder %v317, 50
    %vm325 = vcmp.lt.s32.totalorder %v318, 50
    %vm326 = vcmp.lt.s32.totalorder %v319, 50
    %v327 = vsel %vm320, %v295, 0.0
    %v328 = vsel %vm321, %v296, 0.0
    %v329 = vsel %vm322, %v297, 0.0
    %v330 = vsel %vm323, %v298, 0.0
    %v331 = vsel %vm324, %v299, 0.0
    %v332 = vsel %vm325, %v300, 0.0
    %v333 = vsel %vm326, %v301, 0.0
    %v334 = vld [vmem:[#allocation2] sm:$0x1]
    %vm335 = vcmask 7168
    %v336 = vsel %vm335, %v327, 0.0
    %v337 = vsel %vm335, %v328, 0.0
    %v338 = vadd.f32 %v336, %v337
    %v339 = vsel %vm335, %v329, 0.0
    %v340 = vadd.f32 %v338, %v339
    %v341 = vsel %vm335, %v330, 0.0
    %v342 = vadd.f32 %v340, %v341
    %v343 = vsel %vm335, %v331, 0.0
    %v344 = vadd.f32 %v342, %v343
    %v345 = vsel %vm335, %v332, 0.0
    %v346 = vadd.f32 %v344, %v345
    %v347 = vsel %vm335, %v333, 0.0
    %v348 = vadd.f32 %v346, %v347
    %349 = vadd.xlane.f32.xlu0 %v348
    %v350 = vpop.xlane.xlu0 %349
    %v351 = vrot.slane %v350, 4
    %v352 = vadd.f32 %v350, %v351
    %v353 = vrot.slane %v352, 2
    %v354 = vadd.f32 %v352, %v353
    %v355 = vrot.slane %v354, 1
    %v356 = vadd.f32 %v354, %v355
    %s357 = vtos %v356
    %v358 = vstv %s357
    %v359 = vadd.f32 %v334, %v358
    %vm360 = vcmask 0
    %361 = vst.msk [vmem:[#allocation2] sm:$0x1] %vm360, %v359
    // Predicated region
    $region14: #{tpu_custom_call.1} parent=1 // pred_check
      _
    $region15: #{tpu_custom_call.1} parent=1 // pred_check_branch
      %363 = sbr.rel (0) target = $region17
    $region16: #{tpu_custom_call.1} parent=1 // pred_region
      %s365 = ssub.s32 16, 16
      %366 = vsyncadd [#allocation3], %s365
      %s368 = sshll.u32 [#allocation2], 4
      %s369 = int_to_ptr.vmem [resolvable:$true] %s368
      %371 = dma.vmem_to_hbm [thread:$0]  %s369, 16, %s2, [#allocation3]
    $region17: #{tpu_custom_call.1} parent=1 // pred_fallthru
      _
    // Predicated region
    $region18: #{tpu_custom_call.1} parent=1 // pred_check
      _
    $region19: #{tpu_custom_call.1} parent=1 // pred_check_branch
      %373 = sbr.rel (0) target = $region21
    $region20: #{tpu_custom_call.1} parent=1 // pred_region
      %374 = dma.done [#allocation3], 16
    $region21: #{tpu_custom_call.1} parent=1 // pred_fallthru
      _
    %375 = vsyncpa [#allocation3], 1

</llo_original>
